<compile_context>
chip_gen: v7x
topology: tpu7x:2x2x1
jax: 0.10.0
libtpu: 0.0.40
codegen_flags: <defaults>
</compile_context>

<pallas_src>
import functools
import math

import jax
import jax.numpy as jnp
from jax.experimental import pallas as pl
from jax.experimental.pallas import tpu as pltpu


# ---------------------------------------------------------------------------
# Kernel 1: QKV projection + head split (q pre-scaled by 1/sqrt(d_head))
# ---------------------------------------------------------------------------
def _qkv_proj_kernel(x_ref, w_in_ref, b_in_ref, q_ref, k_ref, v_ref, *,
                     n_heads: int, scale: float):
    # x block: (1, tp, D) in the caller's dtype; cast to bf16 in-vreg (free VPU work,
    # avoids a separate host-side cast pass over x).
    x = x_ref[0].astype(jnp.bfloat16)                       # (tp, D)
    tp, D = x.shape
    d_head = D // n_heads

    # One fat MXU matmul (bf16 in, f32 accumulate), bias added in f32.
    qkv = jnp.dot(x, w_in_ref[...], preferred_element_type=jnp.float32) + b_in_ref[...]

    def split_heads(t):                                      # (tp, D) f32 -> (H, tp, dh) bf16
        t3 = t.reshape(tp, n_heads, d_head)
        return pltpu.einshape("shd->hsd", t3).astype(jnp.bfloat16)

    q_ref[0] = split_heads(qkv[:, 0 * D:1 * D] * scale)      # fold 1/sqrt(d_head) into q
    k_ref[0] = split_heads(qkv[:, 1 * D:2 * D])
    v_ref[0] = split_heads(qkv[:, 2 * D:3 * D])


# ---------------------------------------------------------------------------
# Kernel 2: flash attention (online softmax over KV tiles) + fused out projection
# ---------------------------------------------------------------------------
def _flash_attn_kernel(q_ref, k_ref, v_ref, w_out_ref, b_out_ref, o_ref,
                       m_scr, l_scr, acc_scr, *, causal: bool):
    qi = pl.program_id(1)
    ki = pl.program_id(2)
    n_kv = pl.num_programs(2)

    _, H, tq, dh = q_ref.shape
    tk = k_ref.shape[2]
    D = H * dh

    @pl.when(ki == 0)
    def _init():
        m_scr[...] = jnp.full(m_scr.shape, -jnp.inf, dtype=m_scr.dtype)
        l_scr[...] = jnp.zeros(l_scr.shape, dtype=l_scr.dtype)
        acc_scr[...] = jnp.zeros(acc_scr.shape, dtype=acc_scr.dtype)

    def _online_softmax_step():
        q = q_ref[0]                                         # (H, tq, dh) bf16, pre-scaled
        k = k_ref[0]                                         # (H, tk, dh) bf16
        v = v_ref[0]                                         # (H, tk, dh) bf16

        # Head-batched score matmul; K-transpose absorbed in the contraction.
        s = jnp.einsum("hqd,hkd->hqk", q, k,
                       preferred_element_type=jnp.float32)   # (H, tq, tk) f32

        if causal:
            # Additive finite bias on this (tq, tk) tile only; the diagonal is always
            # unmasked so no row is ever fully masked.
            row = qi * tq + jax.lax.broadcasted_iota(jnp.int32, (tq, tk), 0)
            col = ki * tk + jax.lax.broadcasted_iota(jnp.int32, (tq, tk), 1)
            bias = jnp.where(col > row, jnp.float32(-1e30), jnp.float32(0.0))
            s = s + bias[None]

        # Online softmax update (all f32 — safe on v5e's non-bf16 VPU/EUP).
        m_prev = m_scr[...]
        m_new = jnp.maximum(m_prev, jnp.max(s, axis=-1, keepdims=True))
        alpha = jnp.exp(m_prev - m_new)
        p = jnp.exp(s - m_new)
        l_scr[...] = alpha * l_scr[...] + jnp.sum(p, axis=-1, keepdims=True)
        acc_scr[...] = alpha * acc_scr[...] + jnp.einsum(
            "hqk,hkd->hqd", p.astype(jnp.bfloat16), v,
            preferred_element_type=jnp.float32)
        m_scr[...] = m_new

    if causal:
        # Skip KV tiles that are entirely in the masked (future) region.
        @pl.when(ki * tk <= qi * tq + (tq - 1))
        def _():
            _online_softmax_step()
    else:
        _online_softmax_step()

    @pl.when(ki == n_kv - 1)
    def _finalize():
        # Normalize (reciprocal on the EUP), merge heads once per query tile,
        # then the fused output projection.
        ctx = acc_scr[...] * pl.reciprocal(l_scr[...], approx=True)   # (H, tq, dh) f32
        attn = pltpu.einshape("hsd->shd", ctx).reshape(tq, D).astype(jnp.bfloat16)
        out = jnp.dot(attn, w_out_ref[...],
                      preferred_element_type=jnp.float32) + b_out_ref[...]
        o_ref[0] = out.astype(o_ref.dtype)


# ---------------------------------------------------------------------------
# Wrapper
# ---------------------------------------------------------------------------
def _vmem_limit_bytes(block_bytes: int, scratch_bytes: int = 0) -> int:
    """Scoped-VMEM budget derived from the pipeline blocks (double-buffered) with
    margin for layout padding; clamped to a range that is safe on v5e/v6e/v7x."""
    est = 2 * block_bytes + scratch_bytes
    est = 3 * est + (4 << 20)
    return int(max(32 << 20, min(est, 120 << 20)))


def self_attention(x, w_in, b_in, w_out, b_out, *, n_heads: int,
                   causal_mask: bool = False,
                   q_tile: int = 128, kv_tile: int = 128, proj_tile: int = 128):
    """x: [B, S, D] -> [B, S, D] (same dtype as x)."""
    B, S, D = x.shape
    assert D % n_heads == 0
    d_head = D // n_heads

    tq = min(q_tile, S)
    tk = min(kv_tile, S)
    tp = min(proj_tile, S)
    for t in (tq, tk, tp):
        assert S % t == 0 and (t == S or t % 8 == 0), "tile must divide S and be 8-aligned"

    itemsize = jnp.dtype(x.dtype).itemsize
    # Weights are small and typically stored bf16 in real models; biases stay f32
    # and are added after the f32 accumulation. x is NOT cast on the host.
    w_in_bf = w_in.astype(jnp.bfloat16)
    w_out_bf = w_out.astype(jnp.bfloat16)

    # ---- kernel 1: QKV projection -> head-major (B, H, S, d_head) bf16 ----
    proj_block_bytes = (tp * D * itemsize            # x tile
                        + D * 3 * D * 2              # w_in (bf16)
                        + 3 * D * 4                  # b_in (f32)
                        + 3 * n_heads * tp * d_head * 2)   # q/k/v out tiles
    q_hs, k_hs, v_hs = pl.pallas_call(
        functools.partial(_qkv_proj_kernel, n_heads=n_heads,
                          scale=1.0 / math.sqrt(d_head)),
        out_shape=[jax.ShapeDtypeStruct((B, n_heads, S, d_head), jnp.bfloat16)] * 3,
        grid_spec=pltpu.PrefetchScalarGridSpec(
            num_scalar_prefetch=0,
            grid=(B, S // tp),
            in_specs=[
                pl.BlockSpec((1, tp, D), lambda b, i: (b, i, 0)),
                pl.BlockSpec((D, 3 * D), lambda b, i: (0, 0)),
                pl.BlockSpec((1, 3 * D), lambda b, i: (0, 0)),
            ],
            out_specs=[pl.BlockSpec((1, n_heads, tp, d_head),
                                    lambda b, i: (b, 0, i, 0))] * 3,
        ),
        compiler_params=pltpu.CompilerParams(
            dimension_semantics=("parallel", "parallel"),
            vmem_limit_bytes=_vmem_limit_bytes(proj_block_bytes)),
    )(x, w_in_bf, b_in)

    # ---- kernel 2: flash attention over KV tiles + fused output projection ----
    attn_block_bytes = (n_heads * tq * d_head * 2          # q tile
                        + 2 * n_heads * tk * d_head * 2    # k, v tiles
                        + D * D * 2                        # w_out (bf16)
                        + D * 4                            # b_out (f32)
                        + tq * D * itemsize)               # out tile
    attn_scratch_bytes = (2 * n_heads * tq * 128           # m, l (lane-padded)
                          + n_heads * tq * max(d_head, 128)) * 4
    out = pl.pallas_call(
        functools.partial(_flash_attn_kernel, causal=causal_mask),
        out_shape=jax.ShapeDtypeStruct((B, S, D), x.dtype),
        grid_spec=pltpu.PrefetchScalarGridSpec(
            num_scalar_prefetch=0,
            grid=(B, S // tq, S // tk),
            in_specs=[
                pl.BlockSpec((1, n_heads, tq, d_head), lambda b, qi, ki: (b, 0, qi, 0)),
                pl.BlockSpec((1, n_heads, tk, d_head), lambda b, qi, ki: (b, 0, ki, 0)),
                pl.BlockSpec((1, n_heads, tk, d_head), lambda b, qi, ki: (b, 0, ki, 0)),
                pl.BlockSpec((D, D), lambda b, qi, ki: (0, 0)),
                pl.BlockSpec((1, D), lambda b, qi, ki: (0, 0)),
            ],
            out_specs=pl.BlockSpec((1, tq, D), lambda b, qi, ki: (b, qi, 0)),
            scratch_shapes=[
                pltpu.VMEM((n_heads, tq, 1), jnp.float32),       # running max m
                pltpu.VMEM((n_heads, tq, 1), jnp.float32),       # running sum l
                pltpu.VMEM((n_heads, tq, d_head), jnp.float32),  # context accumulator
            ],
        ),
        compiler_params=pltpu.CompilerParams(
            dimension_semantics=("parallel", "parallel", "arbitrary"),
            vmem_limit_bytes=_vmem_limit_bytes(attn_block_bytes, attn_scratch_bytes)),
    )(q_hs, k_hs, v_hs, w_out_bf, b_out)
    return out


# ---------------------------------------------------------------------------
# Reference + demo
# ---------------------------------------------------------------------------
def _reference(x, w_in, b_in, w_out, b_out, n_heads, causal_mask=False):
    """Plain-JAX f32 reference mirroring the PyTorch forward."""
    B, S, D = x.shape
    d_head = D // n_heads
    qkv = x @ w_in + b_in[0]
    q, k, v = jnp.split(qkv, 3, axis=-1)

    def heads(t):
        return t.reshape(B, S, n_heads, d_head).transpose(0, 2, 1, 3)

    q, k, v = heads(q), heads(k), heads(v)
    scores = (q @ k.transpose(0, 1, 3, 2)) / math.sqrt(d_head)
    if causal_mask:
        mask = jnp.triu(jnp.ones((S, S), bool), 1)
        scores = jnp.where(mask, -jnp.inf, scores)
    w = jax.nn.softmax(scores, axis=-1)
    out = (w @ v).transpose(0, 2, 1, 3).reshape(B, S, D)
    return out @ w_out + b_out[0]


if __name__ == "__main__":
    # Small, module-consistent shapes: batch=2, seq=8, d_embed=32, heads=4.
    B, S, D, H = 2, 8, 32, 4

    key = jax.random.PRNGKey(0)
    kx, kwi, kbi, kwo, kbo = jax.random.split(key, 5)

    x = jax.random.normal(kx, (B, S, D), dtype=jnp.float32)

    # Deterministic nn.Linear-style fan-in init, stored transposed.
    bound_in = 1.0 / math.sqrt(D)
    w_in = jax.random.uniform(kwi, (D, 3 * D), jnp.float32, -bound_in, bound_in)
    b_in = jax.random.uniform(kbi, (1, 3 * D), jnp.float32, -bound_in, bound_in)
    w_out = jax.random.uniform(kwo, (D, D), jnp.float32, -bound_in, bound_in)
    b_out = jax.random.uniform(kbo, (1, D), jnp.float32, -bound_in, bound_in)

    # Run kernel (non-causal and causal) and block.
    out = self_attention(x, w_in, b_in, w_out, b_out, n_heads=H, causal_mask=False)
    out = jax.block_until_ready(out)
    out_c = self_attention(x, w_in, b_in, w_out, b_out, n_heads=H, causal_mask=True)
    out_c = jax.block_until_ready(out_c)

    # Sanity check against the f32 reference (tolerance loosened for the bf16 MXU
    # path + approx reciprocal in the kernel).
    ref = _reference(x, w_in, b_in, w_out, b_out, H, causal_mask=False)
    ref_c = _reference(x, w_in, b_in, w_out, b_out, H, causal_mask=True)
    assert jnp.allclose(out, ref, atol=5e-2, rtol=5e-2)
    assert jnp.allclose(out_c, ref_c, atol=5e-2, rtol=5e-2)

    print("KERNEL_OK")
</pallas_src>

<mosaic_0001>
module attributes {stable_mosaic.version = 11 : i64} {
  func.func @_qkv_proj_kernel(%arg0: i32, %arg1: i32, %arg2: memref<1x8x32xf32, #tpu.memory_space<vmem>>, %arg3: memref<32x96xbf16, #tpu.memory_space<vmem>>, %arg4: memref<1x96xf32, #tpu.memory_space<vmem>>, %arg5: memref<1x4x8x8xbf16, #tpu.memory_space<vmem>>, %arg6: memref<1x4x8x8xbf16, #tpu.memory_space<vmem>>, %arg7: memref<1x4x8x8xbf16, #tpu.memory_space<vmem>>) attributes {dimension_semantics = [#tpu.dimension_semantics<parallel>, #tpu.dimension_semantics<parallel>], iteration_bounds = array<i64: 2, 1>, scalar_prefetch = 0 : i64, scratch_operands = 0 : i64, tpu.core_type = #tpu.core_type<tc>, window_params = [{transform_indices = @transform_0, window_bounds = array<i64: 1, 8, 32>}, {pipeline_mode = #tpu.pipeline_mode<synchronous>, transform_indices = @transform_1, window_bounds = array<i64: 32, 96>}, {pipeline_mode = #tpu.pipeline_mode<synchronous>, transform_indices = @transform_2, window_bounds = array<i64: 1, 96>}, {transform_indices = @transform_3, window_bounds = array<i64: 1, 4, 8, 8>}, {transform_indices = @transform_4, window_bounds = array<i64: 1, 4, 8, 8>}, {transform_indices = @transform_5, window_bounds = array<i64: 1, 4, 8, 8>}]} {
    %c0 = arith.constant 0 : index
    %c0_0 = arith.constant 0 : index
    %c0_1 = arith.constant 0 : index
    %0 = vector.load %arg2[%c0, %c0_0, %c0_1] : memref<1x8x32xf32, #tpu.memory_space<vmem>>, vector<1x8x32xf32>
    %1 = vector.shape_cast %0 : vector<1x8x32xf32> to vector<8x32xf32>
    %2 = arith.truncf %1 : vector<8x32xf32> to vector<8x32xbf16>
    %c0_2 = arith.constant 0 : index
    %c0_3 = arith.constant 0 : index
    %3 = vector.load %arg3[%c0_2, %c0_3] : memref<32x96xbf16, #tpu.memory_space<vmem>>, vector<32x96xbf16>
    %cst = arith.constant dense<0.000000e+00> : vector<8x96xf32>
    %4 = tpu.matmul %2, %3, %cst {dimension_numbers = #tpu.dot_dimension_numbers<[1], [0], [0], [1], [0, 0, 1, 1], [], []>} : vector<8x32xbf16>, vector<32x96xbf16>, vector<8x96xf32> -> vector<8x96xf32>
    %c0_4 = arith.constant 0 : index
    %c0_5 = arith.constant 0 : index
    %5 = vector.load %arg4[%c0_4, %c0_5] : memref<1x96xf32, #tpu.memory_space<vmem>>, vector<1x96xf32>
    %6 = vector.broadcast %5 : vector<1x96xf32> to vector<8x96xf32>
    %7 = arith.addf %4, %6 : vector<8x96xf32>
    %8 = vector.extract_strided_slice %7 {offsets = [0, 0], sizes = [8, 32], strides = [1, 1]} : vector<8x96xf32> to vector<8x32xf32>
    %cst_6 = arith.constant 0.353553385 : f32
    %9 = vector.broadcast %cst_6 : f32 to vector<8x32xf32>
    %10 = arith.mulf %8, %9 : vector<8x32xf32>
    %11 = vector.shape_cast %10 : vector<8x32xf32> to vector<8x4x8xf32>
    %12 = tpu.transpose %11, [1, 0, 2] : vector<8x4x8xf32> -> vector<4x8x8xf32>
    %13 = arith.truncf %12 : vector<4x8x8xf32> to vector<4x8x8xbf16>
    %c0_7 = arith.constant 0 : index
    %c0_8 = arith.constant 0 : index
    %c0_9 = arith.constant 0 : index
    %c0_10 = arith.constant 0 : index
    %14 = vector.load %arg5[%c0_7, %c0_8, %c0_9, %c0_10] : memref<1x4x8x8xbf16, #tpu.memory_space<vmem>>, vector<1x4x8x8xbf16>
    %15 = vector.shape_cast %14 : vector<1x4x8x8xbf16> to vector<4x8x8xbf16>
    %16 = vector.shape_cast %13 : vector<4x8x8xbf16> to vector<1x4x8x8xbf16>
    tpu.vector_store %arg5[%c0_7, %c0_8, %c0_9, %c0_10], %16 {strides = array<i32>} : memref<1x4x8x8xbf16, #tpu.memory_space<vmem>>, vector<1x4x8x8xbf16>,
    %17 = vector.extract_strided_slice %7 {offsets = [0, 32], sizes = [8, 32], strides = [1, 1]} : vector<8x96xf32> to vector<8x32xf32>
    %18 = vector.shape_cast %17 : vector<8x32xf32> to vector<8x4x8xf32>
    %19 = tpu.transpose %18, [1, 0, 2] : vector<8x4x8xf32> -> vector<4x8x8xf32>
    %20 = arith.truncf %19 : vector<4x8x8xf32> to vector<4x8x8xbf16>
    %c0_11 = arith.constant 0 : index
    %c0_12 = arith.constant 0 : index
    %c0_13 = arith.constant 0 : index
    %c0_14 = arith.constant 0 : index
    %21 = vector.load %arg6[%c0_11, %c0_12, %c0_13, %c0_14] : memref<1x4x8x8xbf16, #tpu.memory_space<vmem>>, vector<1x4x8x8xbf16>
    %22 = vector.shape_cast %21 : vector<1x4x8x8xbf16> to vector<4x8x8xbf16>
    %23 = vector.shape_cast %20 : vector<4x8x8xbf16> to vector<1x4x8x8xbf16>
    tpu.vector_store %arg6[%c0_11, %c0_12, %c0_13, %c0_14], %23 {strides = array<i32>} : memref<1x4x8x8xbf16, #tpu.memory_space<vmem>>, vector<1x4x8x8xbf16>,
    %24 = vector.extract_strided_slice %7 {offsets = [0, 64], sizes = [8, 32], strides = [1, 1]} : vector<8x96xf32> to vector<8x32xf32>
    %25 = vector.shape_cast %24 : vector<8x32xf32> to vector<8x4x8xf32>
    %26 = tpu.transpose %25, [1, 0, 2] : vector<8x4x8xf32> -> vector<4x8x8xf32>
    %27 = arith.truncf %26 : vector<4x8x8xf32> to vector<4x8x8xbf16>
    %c0_15 = arith.constant 0 : index
    %c0_16 = arith.constant 0 : index
    %c0_17 = arith.constant 0 : index
    %c0_18 = arith.constant 0 : index
    %28 = vector.load %arg7[%c0_15, %c0_16, %c0_17, %c0_18] : memref<1x4x8x8xbf16, #tpu.memory_space<vmem>>, vector<1x4x8x8xbf16>
    %29 = vector.shape_cast %28 : vector<1x4x8x8xbf16> to vector<4x8x8xbf16>
    %30 = vector.shape_cast %27 : vector<4x8x8xbf16> to vector<1x4x8x8xbf16>
    tpu.vector_store %arg7[%c0_15, %c0_16, %c0_17, %c0_18], %30 {strides = array<i32>} : memref<1x4x8x8xbf16, #tpu.memory_space<vmem>>, vector<1x4x8x8xbf16>,
    return
  }
  func.func @transform_0(%arg0: i32, %arg1: i32) -> (i32, i32, i32) {
    %c0_i32 = arith.constant 0 : i32
    %c0_i32_0 = arith.constant 0 : i32
    return %arg0, %arg1, %c0_i32 : i32, i32, i32
  }
  func.func @transform_1(%arg0: i32, %arg1: i32) -> (i32, i32) {
    %c0_i32 = arith.constant 0 : i32
    %c0_i32_0 = arith.constant 0 : i32
    %c0_i32_1 = arith.constant 0 : i32
    return %c0_i32, %c0_i32_0 : i32, i32
  }
  func.func @transform_2(%arg0: i32, %arg1: i32) -> (i32, i32) {
    %c0_i32 = arith.constant 0 : i32
    %c0_i32_0 = arith.constant 0 : i32
    %c0_i32_1 = arith.constant 0 : i32
    return %c0_i32, %c0_i32_0 : i32, i32
  }
  func.func @transform_3(%arg0: i32, %arg1: i32) -> (i32, i32, i32, i32) {
    %c0_i32 = arith.constant 0 : i32
    %c0_i32_0 = arith.constant 0 : i32
    %c0_i32_1 = arith.constant 0 : i32
    return %arg0, %c0_i32, %arg1, %c0_i32_0 : i32, i32, i32, i32
  }
  func.func @transform_4(%arg0: i32, %arg1: i32) -> (i32, i32, i32, i32) {
    %c0_i32 = arith.constant 0 : i32
    %c0_i32_0 = arith.constant 0 : i32
    %c0_i32_1 = arith.constant 0 : i32
    return %arg0, %c0_i32, %arg1, %c0_i32_0 : i32, i32, i32, i32
  }
  func.func @transform_5(%arg0: i32, %arg1: i32) -> (i32, i32, i32, i32) {
    %c0_i32 = arith.constant 0 : i32
    %c0_i32_0 = arith.constant 0 : i32
    %c0_i32_1 = arith.constant 0 : i32
    return %arg0, %c0_i32, %arg1, %c0_i32_0 : i32, i32, i32, i32
  }
}

</mosaic_0001>

<llo_original>
// kernel: tpu_custom_call.1
$region0: #{tpu_custom_call.1}
  #allocation0 [shape = 'u32[]', space=smem, size = 0x4, offset = 0x4, fixed_abs, tag = 'smem constant byte address 0x4 - core index']
  #allocation1 [shape = 'u32[144,128]{1,0:T(1,128)}', space=vmem, size = 0x12000, scoped, tag = 'internal scratch']
  %s0 = inlined_call_operand.hbm [shape: f32[2,8,32], index: 0, kind: input, shape index: {}]
  %s1 = inlined_call_operand.hbm [shape: bf16[32,96], index: 1, kind: input, shape index: {}]
  %s2 = inlined_call_operand.vmem [shape: f32[1,96], index: 2, kind: input, shape index: {}]
  %s3 = inlined_call_operand.hbm [shape: bf16[2,4,8,8], index: 3, kind: output, shape index: {0}]
  %s4 = inlined_call_operand.hbm [shape: bf16[2,4,8,8], index: 4, kind: output, shape index: {1}]
  %s5 = inlined_call_operand.hbm [shape: bf16[2,4,8,8], index: 5, kind: output, shape index: {2}]
  %6 = xla_tuple %s3, %s4, %s5
  %s7 = sld [smem:[#allocation0]]
  $region69: #{tpu_custom_call.1} parent=0
    _
  %s9 = ssub.s32 1, %s7
  %s10 = scalar_select 0, %s9, %s7
  $region1: #{tpu_custom_call.1} parent=0
    #allocation2 [shape = 'u8[8192]{0}', space=vmem, size = 0x2000, scoped, tag = 'input window, operand 0']
    #allocation3 [shape = 's32[2]{0}', space=sflag, size = 0x8, scoped, tag = 'scoped memory for tpu_custom_call.1']
    #allocation4 [shape = 's32[2]{0}', space=sflag, size = 0x8, scoped, tag = 'scoped memory for tpu_custom_call.1']
    #allocation5 [shape = 'u8[8192]{0}', space=vmem, size = 0x2000, scoped, tag = 'input window, operand 1, single buffered']
    #allocation6 [shape = 's32[1]{0}', space=sflag, size = 0x4, scoped, tag = 'scoped memory for tpu_custom_call.1']
    #allocation7 [shape = 'u8[16384]{0}', space=vmem, size = 0x4000, scoped, tag = 'output window, operand 0']
    #allocation8 [shape = 'u8[16384]{0}', space=vmem, size = 0x4000, scoped, tag = 'output window, operand 1']
    #allocation9 [shape = 's32[2]{0}', space=sflag, size = 0x8, scoped, tag = 'scoped memory for tpu_custom_call.1']
    #allocation10 [shape = 'u8[16384]{0}', space=vmem, size = 0x4000, scoped, tag = 'output window, operand 2']
    %11 = vsyncpa [#allocation3], 0
    %s12 = scalar_lea.sflag [#allocation3], 1
    %13 = vsyncpa %s12, 0
    %14 = vsyncpa [#allocation6], 0
    %15 = vsyncpa [#allocation4], 0
    %s16 = scalar_lea.sflag [#allocation4], 1
    %17 = vsyncpa %s16, 0
    %18 = vsyncpa [#allocation9], 0
    %s19 = scalar_lea.sflag [#allocation9], 1
    %20 = vsyncpa %s19, 0
    loop: start=0, step=1, limit=4
    $region2: #{tpu_custom_call.1} parent=1 // loop_pre_header
      _
    $region3: #{tpu_custom_call.1} parent=1 // loop_header
      %s22 = sphi 0, %s26
      %p23 = scmp.ge.s32.totalorder %s22, 4
      %s29 = sphi 0, %s41
      %s30 = sphi 0, %s37
      %s31 = sphi 0, %s29
      %s32 = sphi 0, %s30
      %s33 = sphi 0, %s31
      %s34 = sphi 0, %s32
      %s46 = sphi 0, %s48
      %s49 = sphi 0, %s46
      %s50 = sphi 0, %s49
      %s66 = sphi 0, %s50
      %s70 = sphi 0, %s70
      %s72 = sphi 0, %s70
      %s73 = sphi 0, %s72
      %s87 = sphi 0, %s73
      %s91 = sphi 0, %s91
      %s93 = sphi 0, %s91
      %s94 = sphi 0, %s93
      %s108 = sphi 0, %s94
      %s116 = sphi 0, %s118
      %s119 = sphi 0, %s116
      %s120 = sphi 0, %s119
      %s136 = sphi 0, %s120
      %s144 = sphi 0, %s146
      %s147 = sphi 0, %s144
      %s148 = sphi 0, %s147
      %s164 = sphi 0, %s148
      %s172 = sphi 0, %s174
      %s175 = sphi 0, %s172
      %s176 = sphi 0, %s175
      %s192 = sphi 0, %s176
    $region4: #{tpu_custom_call.1} parent=1 // loop_header_branch
      %25 = sbr.rel (%p23) target = $region8
    $region5: #{tpu_custom_call.1} parent=1 // loop_body
      %s27 = ssub.s32 %s22, 1
      %s28 = ssub.s32 %s22, 2
      %s35 = sadd.s32 1, %s30
      %p36 = scmp.ge.s32.totalorder %s35, 1
      %s37 = scalar_select %p36, 0, %s35
      %s38 = sadd.s32 1, %s29
      %s39 = scalar_select %p36, %s38, %s29
      %p40 = scmp.ge.s32.totalorder %s39, 2
      %s41 = scalar_select %p40, 0, %s39
      %s42 = ssub.s32 %s29, %s41
      %s43 = ssub.s32 %s30, %s37
      %s44 = sor.u32 %s42, %s43
      %p45 = scmp.eq.s32.totalorder %s44, 0
      %s47 = sadd.s32 %s46, 1
      %s48 = scalar_select %p45, %s46, %s47
      %p51 = pneg %p45
      %p52 = scmp.eq.s32.totalorder %s22, 1
      %p53 = por %p51, %p52
      %p54 = scmp.ne.s32.totalorder %s46, %s49
      %p55 = scmp.eq.s32.totalorder %s22, 0
      %p56 = por %p54, %p55
      %p57 = scmp.ne.s32.totalorder %s46, %s49
      %p58 = scmp.eq.s32.totalorder %s27, 1
      %p59 = por %p57, %p58
      %p60 = scmp.ne.s32.totalorder %s49, %s50
      %p61 = scmp.eq.s32.totalorder %s27, 0
      %p62 = por %p60, %p61
      %p63 = scmp.ne.s32.totalorder %s49, %s50
      %p64 = scmp.eq.s32.totalorder %s28, 1
      %p65 = por %p63, %p64
      %p67 = scmp.ne.s32.totalorder %s50, %s66
      %p68 = scmp.eq.s32.totalorder %s28, 0
      %p69 = por %p67, %p68
      %s71 = sadd.s32 %s70, 1
      %p74 = scmp.eq.s32.totalorder %s22, 1
      %p75 = scmp.ne.s32.totalorder %s70, %s72
      %p76 = scmp.eq.s32.totalorder %s22, 0
      %p77 = por %p75, %p76
      %p78 = scmp.ne.s32.totalorder %s70, %s72
      %p79 = scmp.eq.s32.totalorder %s27, 1
      %p80 = por %p78, %p79
      %p81 = scmp.ne.s32.totalorder %s72, %s73
      %p82 = scmp.eq.s32.totalorder %s27, 0
      %p83 = por %p81, %p82
      %p84 = scmp.ne.s32.totalorder %s72, %s73
      %p85 = scmp.eq.s32.totalorder %s28, 1
      %p86 = por %p84, %p85
      %p88 = scmp.ne.s32.totalorder %s73, %s87
      %p89 = scmp.eq.s32.totalorder %s28, 0
      %p90 = por %p88, %p89
      %s92 = sadd.s32 %s91, 1
      %p95 = scmp.eq.s32.totalorder %s22, 1
      %p96 = scmp.ne.s32.totalorder %s91, %s93
      %p97 = scmp.eq.s32.totalorder %s22, 0
      %p98 = por %p96, %p97
      %p99 = scmp.ne.s32.totalorder %s91, %s93
      %p100 = scmp.eq.s32.totalorder %s27, 1
      %p101 = por %p99, %p100
      %p102 = scmp.ne.s32.totalorder %s93, %s94
      %p103 = scmp.eq.s32.totalorder %s27, 0
      %p104 = por %p102, %p103
      %p105 = scmp.ne.s32.totalorder %s93, %s94
      %p106 = scmp.eq.s32.totalorder %s28, 1
      %p107 = por %p105, %p106
      %p109 = scmp.ne.s32.totalorder %s94, %s108
      %p110 = scmp.eq.s32.totalorder %s28, 0
      %p111 = por %p109, %p110
      %s112 = ssub.s32 %s29, %s41
      %s113 = ssub.s32 %s30, %s37
      %s114 = sor.u32 %s112, %s113
      %p115 = scmp.eq.s32.totalorder %s114, 0
      %s117 = sadd.s32 %s116, 1
      %s118 = scalar_select %p115, %s116, %s117
      %p121 = pneg %p115
      %p122 = scmp.eq.s32.totalorder %s22, 1
      %p123 = por %p121, %p122
      %p124 = scmp.ne.s32.totalorder %s116, %s119
      %p125 = scmp.eq.s32.totalorder %s22, 0
      %p126 = por %p124, %p125
      %p127 = scmp.ne.s32.totalorder %s116, %s119
      %p128 = scmp.eq.s32.totalorder %s27, 1
      %p129 = por %p127, %p128
      %p130 = scmp.ne.s32.totalorder %s119, %s120
      %p131 = scmp.eq.s32.totalorder %s27, 0
      %p132 = por %p130, %p131
      %p133 = scmp.ne.s32.totalorder %s119, %s120
      %p134 = scmp.eq.s32.totalorder %s28, 1
      %p135 = por %p133, %p134
      %p137 = scmp.ne.s32.totalorder %s120, %s136
      %p138 = scmp.eq.s32.totalorder %s28, 0
      %p139 = por %p137, %p138
      %s140 = ssub.s32 %s29, %s41
      %s141 = ssub.s32 %s30, %s37
      %s142 = sor.u32 %s140, %s141
      %p143 = scmp.eq.s32.totalorder %s142, 0
      %s145 = sadd.s32 %s144, 1
      %s146 = scalar_select %p143, %s144, %s145
      %p149 = pneg %p143
      %p150 = scmp.eq.s32.totalorder %s22, 1
      %p151 = por %p149, %p150
      %p152 = scmp.ne.s32.totalorder %s144, %s147
      %p153 = scmp.eq.s32.totalorder %s22, 0
      %p154 = por %p152, %p153
      %p155 = scmp.ne.s32.totalorder %s144, %s147
      %p156 = scmp.eq.s32.totalorder %s27, 1
      %p157 = por %p155, %p156
      %p158 = scmp.ne.s32.totalorder %s147, %s148
      %p159 = scmp.eq.s32.totalorder %s27, 0
      %p160 = por %p158, %p159
      %p161 = scmp.ne.s32.totalorder %s147, %s148
      %p162 = scmp.eq.s32.totalorder %s28, 1
      %p163 = por %p161, %p162
      %p165 = scmp.ne.s32.totalorder %s148, %s164
      %p166 = scmp.eq.s32.totalorder %s28, 0
      %p167 = por %p165, %p166
      %s168 = ssub.s32 %s29, %s41
      %s169 = ssub.s32 %s30, %s37
      %s170 = sor.u32 %s168, %s169
      %p171 = scmp.eq.s32.totalorder %s170, 0
      %s173 = sadd.s32 %s172, 1
      %s174 = scalar_select %p171, %s172, %s173
      %p177 = pneg %p171
      %p178 = scmp.eq.s32.totalorder %s22, 1
      %p179 = por %p177, %p178
      %p180 = scmp.ne.s32.totalorder %s172, %s175
      %p181 = scmp.eq.s32.totalorder %s22, 0
      %p182 = por %p180, %p181
      %p183 = scmp.ne.s32.totalorder %s172, %s175
      %p184 = scmp.eq.s32.totalorder %s27, 1
      %p185 = por %p183, %p184
      %p186 = scmp.ne.s32.totalorder %s175, %s176
      %p187 = scmp.eq.s32.totalorder %s27, 0
      %p188 = por %p186, %p187
      %p189 = scmp.ne.s32.totalorder %s175, %s176
      %p190 = scmp.eq.s32.totalorder %s28, 1
      %p191 = por %p189, %p190
      %p193 = scmp.ne.s32.totalorder %s176, %s192
      %p194 = scmp.eq.s32.totalorder %s28, 0
      %p195 = por %p193, %p194
      %p196 = scmp.le.s32.totalorder 1, %s22
      %p197 = scmp.lt.s32.totalorder %s22, 3
      %p198 = pnand %p196, %p197
      %p199 = pneg %p198
      // Predicated region
      $region9: #{tpu_custom_call.1} parent=5 // pred_check
        _
      $region10: #{tpu_custom_call.1} parent=5 // pred_check_branch
        %201 = sbr.rel (%p198) target = $region12
      $region11: #{tpu_custom_call.1} parent=5 // pred_region
        %s202 = ssub.s32 %s22, 1
        // Predicated region
        $region13: #{tpu_custom_call.1} parent=11 // pred_check
          %p203 = pneg %p83
        $region14: #{tpu_custom_call.1} parent=11 // pred_check_branch
          %205 = sbr.rel (%p203) target = $region16
        $region15: #{tpu_custom_call.1} parent=11 // pred_region
          %s207 = ssub.s32 256, 256
          %208 = vsyncadd [#allocation6], %s207
          %s209 = sshll.u32 [#allocation5], 4
          %s210 = int_to_ptr.vmem [resolvable:$true] %s209
          %215 = dma.hbm_to_vmem [thread:$0]  %s1, 256, %s210, [#allocation6], 64, 64, 4
        $region16: #{tpu_custom_call.1} parent=11 // pred_fallthru
          _
        // Predicated region
        $region17: #{tpu_custom_call.1} parent=11 // pred_check
          %p216 = pneg %p104
        $region18: #{tpu_custom_call.1} parent=11 // pred_check_branch
          %218 = sbr.rel (%p216) target = $region20
        $region19: #{tpu_custom_call.1} parent=11 // pred_region
          _
        $region20: #{tpu_custom_call.1} parent=11 // pred_fallthru
          _
      $region12: #{tpu_custom_call.1} parent=5 // pred_fallthru
        _
      %p219 = scmp.lt.s32.totalorder %s22, 2
      // Predicated region
      $region21: #{tpu_custom_call.1} parent=5 // pred_check
        %p220 = pneg %p219
      $region22: #{tpu_custom_call.1} parent=5 // pred_check_branch
        %222 = sbr.rel (%p220) target = $region24
      $region23: #{tpu_custom_call.1} parent=5 // pred_region
        // Predicated region
        $region25: #{tpu_custom_call.1} parent=23 // pred_check
          %p223 = pneg %p56
        $region26: #{tpu_custom_call.1} parent=23 // pred_check_branch
          %225 = sbr.rel (%p223) target = $region28
        $region27: #{tpu_custom_call.1} parent=23 // pred_region
          %s226 = sand.u32 %s46, 1
          %s227 = scalar_lea.sflag [#allocation3], %s226
          %s228 = sand.u32 %s46, 1
          %s229 = smul.addr %s228, 8
          %s230 = scalar_lea.vmem [#allocation2], %s229
          %s232 = ssub.s32 128, 128
          %233 = vsyncadd %s227, %s232
          %s234 = sadd.s32 %s30, %s29
          %s235 = smul.addr %s234, 128
          %s236 = scalar_lea.hbm %s0, %s235
          %s238 = sshll.u32 %s230, 4
          %s239 = int_to_ptr.vmem [resolvable:$true] %s238
          %241 = dma.hbm_to_vmem [thread:$0]  %s236, 128, %s239, %s227
        $region28: #{tpu_custom_call.1} parent=23 // pred_fallthru
          _
      $region24: #{tpu_custom_call.1} parent=5 // pred_fallthru
        _
      %p242 = scmp.le.s32.totalorder 1, %s22
      %p243 = scmp.lt.s32.totalorder %s22, 3
      %p244 = pnand %p242, %p243
      %p245 = pneg %p244
      // Predicated region
      $region29: #{tpu_custom_call.1} parent=5 // pred_check
        _
      $region30: #{tpu_custom_call.1} parent=5 // pred_check_branch
        %247 = sbr.rel (%p244) target = $region32
      $region31: #{tpu_custom_call.1} parent=5 // pred_region
        %s248 = ssub.s32 %s22, 1
        %s249 = sand.u32 %s49, 1
        %s250 = scalar_lea.sflag [#allocation3], %s249
        %s251 = sand.u32 %s49, 1
        %s252 = smul.addr %s251, 8
        %s253 = scalar_lea.vmem [#allocation2], %s252
        // Predicated region
        $region33: #{tpu_custom_call.1} parent=31 // pred_check
          %p254 = pneg %p62
        $region34: #{tpu_custom_call.1} parent=31 // pred_check_branch
          %256 = sbr.rel (%p254) target = $region36
        $region35: #{tpu_custom_call.1} parent=31 // pred_region
          %257 = dma.done %s250, 128
        $region36: #{tpu_custom_call.1} parent=31 // pred_fallthru
          _
        // Predicated region
        $region37: #{tpu_custom_call.1} parent=31 // pred_check
          %p258 = pneg %p83
        $region38: #{tpu_custom_call.1} parent=31 // pred_check_branch
          %260 = sbr.rel (%p258) target = $region40
        $region39: #{tpu_custom_call.1} parent=31 // pred_region
          %261 = dma.done [#allocation6], 256
        $region40: #{tpu_custom_call.1} parent=31 // pred_fallthru
          _
        %s262 = sand.u32 %s49, 1
        %s263 = scalar_lea.sflag [#allocation3], %s262
        %s264 = sand.u32 %s49, 1
        %s265 = smul.addr %s264, 8
        %s266 = scalar_lea.vmem [#allocation2], %s265
        %p267 = pneg %p62
        %p268 = pneg %p59
        %p269 = pneg %p83
        %p270 = pneg %p80
        %p271 = pneg %p104
        %p272 = pneg %p101
        %p273 = pneg %p132
        %p274 = pneg %p129
        %s275 = sand.u32 %s119, 1
        %s276 = scalar_lea.sflag [#allocation4], %s275
        %s277 = sand.u32 %s119, 1
        %s278 = smul.addr %s277, 16
        %s279 = scalar_lea.vmem [#allocation7], %s278
        %p280 = pneg %p160
        %p281 = pneg %p157
        %s282 = sand.u32 %s27, 1
        %s283 = scalar_lea.sflag [#allocation9], %s282
        %s284 = sand.u32 %s147, 1
        %s285 = smul.addr %s284, 16
        %s286 = scalar_lea.vmem [#allocation8], %s285
        %p287 = pneg %p188
        %p288 = pneg %p185
        %s289 = sand.u32 %s27, 1
        %s290 = scalar_lea.sflag [#allocation9], %s289
        %s291 = sand.u32 %s175, 1
        %s292 = smul.addr %s291, 16
        %s293 = scalar_lea.vmem [#allocation10], %s292
        %v295 = vld [vmem:[%s253] sm:$0xff]
        %v296 = vpack.c.bf16 %v295, %v295
        %v297 = vld [vmem:[#allocation5] sm:$0xf]
        %v298 = vld [vmem:[#allocation5 + $0x4] sm:$0xf]
        %v299 = vld [vmem:[#allocation5 + $0x8] sm:$0xf]
        %v300 = vld [vmem:[#allocation5 + $0xc] sm:$0xf]
        %v301 = vld [vmem:[%s2] sm:$0x1]
        %v303 = vlaneseq
        %v304 = vshrl.u32 %v303, 7
        %v305 = vsub.s32 0, %v304
        %v306 = vrot.slane %v301, %v305
        %v312 = vunpack.c.l.b16 %v297
        %v313 = vunpack.c.l.b16 %v298
        %v314 = vunpack.c.l.b16 %v299
        %v315 = vunpack.c.l.b16 %v300
        %v316 = vpack.c.b16 %v313, %v312
        %v317 = vpack.c.b16 %v315, %v314
        %vm320 = vcmask 261120
        %v322 = vsel %vm320, %v296, 0
        %324 = vmatprep.subr.bf16.mxu0 0
        %325 = vmatpush1.bf16.msra.mxu0 %v316
        %326 = vmatprep.subr.bf16.mxu0 0
        %327 = vmatpush1.bf16.msra.mxu0 %v317
        %328 = vmatprep.subr.bf16.mxu0 0
        %329 = vmatpush1.bf16.msra.mxu0 0
        %330 = vmatprep.subr.bf16.mxu0 0
        %331 = vmatpush1.bf16.msra.mxu0 0
        %332 = vmatprep.subr.bf16.mxu0 0
        %333 = vmatpush1.bf16.msra.mxu0 0
        %334 = vmatprep.subr.bf16.mxu0 0
        %335 = vmatpush1.bf16.msra.mxu0 0
        %336 = vmatprep.subr.bf16.mxu0 0
        %337 = vmatpush1.bf16.msra.mxu0 0
        %338 = vmatprep.subr.bf16.mxu0 0
        %339 = vmatpush1.bf16.msra.mxu0 0
        %340 = vmatprep.subr.bf16.mxu0 0
        %341 = vmatpush1.bf16.msra.mxu0 0
        %342 = vmatprep.subr.bf16.mxu0 0
        %343 = vmatpush1.bf16.msra.mxu0 0
        %344 = vmatprep.subr.bf16.mxu0 0
        %345 = vmatpush1.bf16.msra.mxu0 0
        %346 = vmatprep.subr.bf16.mxu0 0
        %347 = vmatpush1.bf16.msra.mxu0 0
        %348 = vmatprep.subr.bf16.mxu0 0
        %349 = vmatpush1.bf16.msra.mxu0 0
        %350 = vmatprep.subr.bf16.mxu0 0
        %351 = vmatpush1.bf16.msra.mxu0 0
        %352 = vmatprep.subr.bf16.mxu0 0
        %353 = vmatpush1.bf16.msra.mxu0 0
        %354 = vmatprep.subr.bf16.mxu0 0
        %355 = vmatpush1.bf16.msra.mxu0 0
        %356 = vmatprep.mubr.bf16.mxu0 0
        %357 = vmatmul.mubr.bf16.gmra.mrb[0].mxu0 %v322
        %v358 = vpop.f32.mrb[0].mxu0
        %v359 = vadd.f32 %v306, %v358
        %v360 = vpop.f32.mrb[0].mxu0
        %v361 = vpop.f32.mrb[0].mxu0
        %v362 = vpop.f32.mrb[0].mxu0
        %363 = vdwg.mxu0
        %v364 = vmul.f32 %v359, 0.35355338
        %366 = vrot.lane.b32.xlu0 %v364, 120
        %v367 = vpop.permute.xlu0 %366
        %369 = vrot.lane.b32.xlu0 %v364, 112
        %v370 = vpop.permute.xlu0 %369
        %372 = vrot.lane.b32.xlu0 %v364, 104
        %v373 = vpop.permute.xlu0 %372
        %v375 = vcombine.low %v364, %v370
        %v376 = vcombine.high %v364, %v370
        %v378 = vunpack.c.l.s4 1983009808
        %v379 = vunpack.c.0.s8 %v378
        %v380 = vlaneseq
        %v381 = vshrl.u32 %v380, 7
        %v382 = vsub.s32 %v379, %v381
        %v383 = vrot.slane %v375, %v382
        %v385 = vunpack.c.l.s4 1983009808
        %v386 = vunpack.c.0.s8 %v385
        %v387 = vlaneseq
        %v388 = vshrl.u32 %v387, 7
        %v389 = vsub.s32 %v386, %v388
        %v390 = vrot.slane %v376, %v389
        %v391 = vcombine.low %v367, %v373
        %v392 = vcombine.high %v367, %v373
        %v394 = vunpack.c.l.s4 1983009808
        %v395 = vunpack.c.0.s8 %v394
        %v396 = vlaneseq
        %v397 = vshrl.u32 %v396, 7
        %v398 = vsub.s32 %v395, %v397
        %v399 = vrot.slane %v391, %v398
        %v401 = vunpack.c.l.s4 1983009808
        %v402 = vunpack.c.0.s8 %v401
        %v403 = vlaneseq
        %v404 = vshrl.u32 %v403, 7
        %v405 = vsub.s32 %v402, %v404
        %v406 = vrot.slane %v392, %v405
        %v407 = vcombine.low %v383, %v399
        %v408 = vcombine.high %v383, %v399
        %v410 = vunpack.c.l.s4 1934713408
        %v411 = vunpack.c.0.s8 %v410
        %v412 = vlaneseq
        %v413 = vshrl.u32 %v412, 7
        %v414 = vsub.s32 %v411, %v413
        %v415 = vrot.slane %v407, %v414
        %v417 = vunpack.c.l.s4 1934713408
        %v418 = vunpack.c.0.s8 %v417
        %v419 = vlaneseq
        %v420 = vshrl.u32 %v419, 7
        %v421 = vsub.s32 %v418, %v420
        %v422 = vrot.slane %v408, %v421
        %v423 = vcombine.low %v390, %v406
        %v424 = vcombine.high %v390, %v406
        %v426 = vunpack.c.l.s4 1934713408
        %v427 = vunpack.c.0.s8 %v426
        %v428 = vlaneseq
        %v429 = vshrl.u32 %v428, 7
        %v430 = vsub.s32 %v427, %v429
        %v431 = vrot.slane %v423, %v430
        %v433 = vunpack.c.l.s4 1934713408
        %v434 = vunpack.c.0.s8 %v433
        %v435 = vlaneseq
        %v436 = vshrl.u32 %v435, 7
        %v437 = vsub.s32 %v434, %v436
        %v438 = vrot.slane %v424, %v437
        %v439 = vcombine.high %v415, 0.0
        %v440 = vcombine.high %v422, 0.0
        %v441 = vcombine.high %v431, 0.0
        %v442 = vcombine.high %v438, 0.0
        %v443 = vcombine.low %v415, %v422
        %v445 = vunpack.c.l.s4 1983009808
        %v446 = vunpack.c.0.s8 %v445
        %v447 = vlaneseq
        %v448 = vshrl.u32 %v447, 7
        %v449 = vsub.s32 %v446, %v448
        %v450 = vrot.slane %v443, %v449
        %v451 = vcombine.low %v439, %v440
        %v453 = vunpack.c.l.s4 1983009808
        %v454 = vunpack.c.0.s8 %v453
        %v455 = vlaneseq
        %v456 = vshrl.u32 %v455, 7
        %v457 = vsub.s32 %v454, %v456
        %v458 = vrot.slane %v451, %v457
        %v459 = vcombine.low %v431, %v438
        %v461 = vunpack.c.l.s4 1983009808
        %v462 = vunpack.c.0.s8 %v461
        %v463 = vlaneseq
        %v464 = vshrl.u32 %v463, 7
        %v465 = vsub.s32 %v462, %v464
        %v466 = vrot.slane %v459, %v465
        %v467 = vcombine.low %v441, %v442
        %v469 = vunpack.c.l.s4 1983009808
        %v470 = vunpack.c.0.s8 %v469
        %v471 = vlaneseq
        %v472 = vshrl.u32 %v471, 7
        %v473 = vsub.s32 %v470, %v472
        %v474 = vrot.slane %v467, %v473
        %v475 = vcombine.low %v450, %v458
        %v476 = vcombine.high %v450, %v458
        %v478 = vunpack.c.l.s4 1934713408
        %v479 = vunpack.c.0.s8 %v478
        %v480 = vlaneseq
        %v481 = vshrl.u32 %v480, 7
        %v482 = vsub.s32 %v479, %v481
        %v483 = vrot.slane %v475, %v482
        %v485 = vunpack.c.l.s4 1934713408
        %v486 = vunpack.c.0.s8 %v485
        %v487 = vlaneseq
        %v488 = vshrl.u32 %v487, 7
        %v489 = vsub.s32 %v486, %v488
        %v490 = vrot.slane %v476, %v489
        %v491 = vcombine.low %v466, %v474
        %v492 = vcombine.high %v466, %v474
        %v494 = vunpack.c.l.s4 1934713408
        %v495 = vunpack.c.0.s8 %v494
        %v496 = vlaneseq
        %v497 = vshrl.u32 %v496, 7
        %v498 = vsub.s32 %v495, %v497
        %v499 = vrot.slane %v491, %v498
        %v501 = vunpack.c.l.s4 1934713408
        %v502 = vunpack.c.0.s8 %v501
        %v503 = vlaneseq
        %v504 = vshrl.u32 %v503, 7
        %v505 = vsub.s32 %v502, %v504
        %v506 = vrot.slane %v492, %v505
        %v507 = vcombine.low %v483, %v499
        %v508 = vcombine.high %v483, %v499
        %v509 = vcombine.low %v490, %v506
        %v510 = vcombine.high %v490, %v506
        %v511 = vpack.c.bf16 %v507, %v507
        %v512 = vpack.c.bf16 %v508, %v508
        %v513 = vpack.c.bf16 %v509, %v509
        %v514 = vpack.c.bf16 %v510, %v510
        %vm515 = vcmask 60416
        %516 = vst.msk [vmem:[%s279] sm:$0xf] %vm515, %v511
        %517 = vst.msk [vmem:[%s279 + $0x4] sm:$0xf] %vm515, %v512
        %518 = vst.msk [vmem:[%s279 + $0x8] sm:$0xf] %vm515, %v513
        %519 = vst.msk [vmem:[%s279 + $0xc] sm:$0xf] %vm515, %v514
        %521 = vrot.lane.b32.xlu0 %v359, 120
        %v522 = vpop.permute.xlu0 %521
        %523 = vrot.lane.b32.xlu0 %v359, 112
        %v524 = vpop.permute.xlu0 %523
        %525 = vrot.lane.b32.xlu0 %v359, 104
        %v526 = vpop.permute.xlu0 %525
        %527 = vrot.lane.b32.xlu0 %v359, 96
        %v528 = vpop.permute.xlu0 %527
        %529 = vrot.lane.b32.xlu0 %v522, 96
        %v530 = vpop.permute.xlu0 %529
        %531 = vrot.lane.b32.xlu0 %v524, 96
        %v532 = vpop.permute.xlu0 %531
        %533 = vrot.lane.b32.xlu0 %v526, 96
        %v534 = vpop.permute.xlu0 %533
        %v539 = vcombine.low %v528, %v532
        %v540 = vcombine.high %v528, %v532
        %v542 = vunpack.c.l.s4 1983009808
        %v543 = vunpack.c.0.s8 %v542
        %v544 = vlaneseq
        %v545 = vshrl.u32 %v544, 7
        %v546 = vsub.s32 %v543, %v545
        %v547 = vrot.slane %v539, %v546
        %v549 = vunpack.c.l.s4 1983009808
        %v550 = vunpack.c.0.s8 %v549
        %v551 = vlaneseq
        %v552 = vshrl.u32 %v551, 7
        %v553 = vsub.s32 %v550, %v552
        %v554 = vrot.slane %v540, %v553
        %v555 = vcombine.low %v530, %v534
        %v556 = vcombine.high %v530, %v534
        %v558 = vunpack.c.l.s4 1983009808
        %v559 = vunpack.c.0.s8 %v558
        %v560 = vlaneseq
        %v561 = vshrl.u32 %v560, 7
        %v562 = vsub.s32 %v559, %v561
        %v563 = vrot.slane %v555, %v562
        %v565 = vunpack.c.l.s4 1983009808
        %v566 = vunpack.c.0.s8 %v565
        %v567 = vlaneseq
        %v568 = vshrl.u32 %v567, 7
        %v569 = vsub.s32 %v566, %v568
        %v570 = vrot.slane %v556, %v569
        %v571 = vcombine.low %v547, %v563
        %v572 = vcombine.high %v547, %v563
        %v574 = vunpack.c.l.s4 1934713408
        %v575 = vunpack.c.0.s8 %v574
        %v576 = vlaneseq
        %v577 = vshrl.u32 %v576, 7
        %v578 = vsub.s32 %v575, %v577
        %v579 = vrot.slane %v571, %v578
        %v581 = vunpack.c.l.s4 1934713408
        %v582 = vunpack.c.0.s8 %v581
        %v583 = vlaneseq
        %v584 = vshrl.u32 %v583, 7
        %v585 = vsub.s32 %v582, %v584
        %v586 = vrot.slane %v572, %v585
        %v587 = vcombine.low %v554, %v570
        %v588 = vcombine.high %v554, %v570
        %v590 = vunpack.c.l.s4 1934713408
        %v591 = vunpack.c.0.s8 %v590
        %v592 = vlaneseq
        %v593 = vshrl.u32 %v592, 7
        %v594 = vsub.s32 %v591, %v593
        %v595 = vrot.slane %v587, %v594
        %v597 = vunpack.c.l.s4 1934713408
        %v598 = vunpack.c.0.s8 %v597
        %v599 = vlaneseq
        %v600 = vshrl.u32 %v599, 7
        %v601 = vsub.s32 %v598, %v600
        %v602 = vrot.slane %v588, %v601
        %v603 = vcombine.high %v579, 0.0
        %v604 = vcombine.high %v586, 0.0
        %v605 = vcombine.high %v595, 0.0
        %v606 = vcombine.high %v602, 0.0
        %v607 = vcombine.low %v579, %v586
        %v609 = vunpack.c.l.s4 1983009808
        %v610 = vunpack.c.0.s8 %v609
        %v611 = vlaneseq
        %v612 = vshrl.u32 %v611, 7
        %v613 = vsub.s32 %v610, %v612
        %v614 = vrot.slane %v607, %v613
        %v615 = vcombine.low %v603, %v604
        %v617 = vunpack.c.l.s4 1983009808
        %v618 = vunpack.c.0.s8 %v617
        %v619 = vlaneseq
        %v620 = vshrl.u32 %v619, 7
        %v621 = vsub.s32 %v618, %v620
        %v622 = vrot.slane %v615, %v621
        %v623 = vcombine.low %v595, %v602
        %v625 = vunpack.c.l.s4 1983009808
        %v626 = vunpack.c.0.s8 %v625
        %v627 = vlaneseq
        %v628 = vshrl.u32 %v627, 7
        %v629 = vsub.s32 %v626, %v628
        %v630 = vrot.slane %v623, %v629
        %v631 = vcombine.low %v605, %v606
        %v633 = vunpack.c.l.s4 1983009808
        %v634 = vunpack.c.0.s8 %v633
        %v635 = vlaneseq
        %v636 = vshrl.u32 %v635, 7
        %v637 = vsub.s32 %v634, %v636
        %v638 = vrot.slane %v631, %v637
        %v639 = vcombine.low %v614, %v622
        %v640 = vcombine.high %v614, %v622
        %v642 = vunpack.c.l.s4 1934713408
        %v643 = vunpack.c.0.s8 %v642
        %v644 = vlaneseq
        %v645 = vshrl.u32 %v644, 7
        %v646 = vsub.s32 %v643, %v645
        %v647 = vrot.slane %v639, %v646
        %v649 = vunpack.c.l.s4 1934713408
        %v650 = vunpack.c.0.s8 %v649
        %v651 = vlaneseq
        %v652 = vshrl.u32 %v651, 7
        %v653 = vsub.s32 %v650, %v652
        %v654 = vrot.slane %v640, %v653
        %v655 = vcombine.low %v630, %v638
        %v656 = vcombine.high %v630, %v638
        %v658 = vunpack.c.l.s4 1934713408
        %v659 = vunpack.c.0.s8 %v658
        %v660 = vlaneseq
        %v661 = vshrl.u32 %v660, 7
        %v662 = vsub.s32 %v659, %v661
        %v663 = vrot.slane %v655, %v662
        %v665 = vunpack.c.l.s4 1934713408
        %v666 = vunpack.c.0.s8 %v665
        %v667 = vlaneseq
        %v668 = vshrl.u32 %v667, 7
        %v669 = vsub.s32 %v666, %v668
        %v670 = vrot.slane %v656, %v669
        %v671 = vcombine.low %v647, %v663
        %v672 = vcombine.high %v647, %v663
        %v673 = vcombine.low %v654, %v670
        %v674 = vcombine.high %v654, %v670
        %v675 = vpack.c.bf16 %v671, %v671
        %v676 = vpack.c.bf16 %v672, %v672
        %v677 = vpack.c.bf16 %v673, %v673
        %v678 = vpack.c.bf16 %v674, %v674
        %679 = vst.msk [vmem:[%s286] sm:$0xf] %vm515, %v675
        %680 = vst.msk [vmem:[%s286 + $0x4] sm:$0xf] %vm515, %v676
        %681 = vst.msk [vmem:[%s286 + $0x8] sm:$0xf] %vm515, %v677
        %682 = vst.msk [vmem:[%s286 + $0xc] sm:$0xf] %vm515, %v678
        %683 = vrot.lane.b32.xlu0 %v359, 64
        %v684 = vpop.permute.xlu0 %683
        %685 = vrot.lane.b32.xlu0 %v522, 64
        %v686 = vpop.permute.xlu0 %685
        %687 = vrot.lane.b32.xlu0 %v524, 64
        %v688 = vpop.permute.xlu0 %687
        %689 = vrot.lane.b32.xlu0 %v526, 64
        %v690 = vpop.permute.xlu0 %689
        %v695 = vcombine.low %v684, %v688
        %v696 = vcombine.high %v684, %v688
        %v698 = vunpack.c.l.s4 1983009808
        %v699 = vunpack.c.0.s8 %v698
        %v700 = vlaneseq
        %v701 = vshrl.u32 %v700, 7
        %v702 = vsub.s32 %v699, %v701
        %v703 = vrot.slane %v695, %v702
        %v705 = vunpack.c.l.s4 1983009808
        %v706 = vunpack.c.0.s8 %v705
        %v707 = vlaneseq
        %v708 = vshrl.u32 %v707, 7
        %v709 = vsub.s32 %v706, %v708
        %v710 = vrot.slane %v696, %v709
        %v711 = vcombine.low %v686, %v690
        %v712 = vcombine.high %v686, %v690
        %v714 = vunpack.c.l.s4 1983009808
        %v715 = vunpack.c.0.s8 %v714
        %v716 = vlaneseq
        %v717 = vshrl.u32 %v716, 7
        %v718 = vsub.s32 %v715, %v717
        %v719 = vrot.slane %v711, %v718
        %v721 = vunpack.c.l.s4 1983009808
        %v722 = vunpack.c.0.s8 %v721
        %v723 = vlaneseq
        %v724 = vshrl.u32 %v723, 7
        %v725 = vsub.s32 %v722, %v724
        %v726 = vrot.slane %v712, %v725
        %v727 = vcombine.low %v703, %v719
        %v728 = vcombine.high %v703, %v719
        %v730 = vunpack.c.l.s4 1934713408
        %v731 = vunpack.c.0.s8 %v730
        %v732 = vlaneseq
        %v733 = vshrl.u32 %v732, 7
        %v734 = vsub.s32 %v731, %v733
        %v735 = vrot.slane %v727, %v734
        %v737 = vunpack.c.l.s4 1934713408
        %v738 = vunpack.c.0.s8 %v737
        %v739 = vlaneseq
        %v740 = vshrl.u32 %v739, 7
        %v741 = vsub.s32 %v738, %v740
        %v742 = vrot.slane %v728, %v741
        %v743 = vcombine.low %v710, %v726
        %v744 = vcombine.high %v710, %v726
        %v746 = vunpack.c.l.s4 1934713408
        %v747 = vunpack.c.0.s8 %v746
        %v748 = vlaneseq
        %v749 = vshrl.u32 %v748, 7
        %v750 = vsub.s32 %v747, %v749
        %v751 = vrot.slane %v743, %v750
        %v753 = vunpack.c.l.s4 1934713408
        %v754 = vunpack.c.0.s8 %v753
        %v755 = vlaneseq
        %v756 = vshrl.u32 %v755, 7
        %v757 = vsub.s32 %v754, %v756
        %v758 = vrot.slane %v744, %v757
        %v759 = vcombine.high %v735, 0.0
        %v760 = vcombine.high %v742, 0.0
        %v761 = vcombine.high %v751, 0.0
        %v762 = vcombine.high %v758, 0.0
        %v763 = vcombine.low %v735, %v742
        %v765 = vunpack.c.l.s4 1983009808
        %v766 = vunpack.c.0.s8 %v765
        %v767 = vlaneseq
        %v768 = vshrl.u32 %v767, 7
        %v769 = vsub.s32 %v766, %v768
        %v770 = vrot.slane %v763, %v769
        %v771 = vcombine.low %v759, %v760
        %v773 = vunpack.c.l.s4 1983009808
        %v774 = vunpack.c.0.s8 %v773
        %v775 = vlaneseq
        %v776 = vshrl.u32 %v775, 7
        %v777 = vsub.s32 %v774, %v776
        %v778 = vrot.slane %v771, %v777
        %v779 = vcombine.low %v751, %v758
        %v781 = vunpack.c.l.s4 1983009808
        %v782 = vunpack.c.0.s8 %v781
        %v783 = vlaneseq
        %v784 = vshrl.u32 %v783, 7
        %v785 = vsub.s32 %v782, %v784
        %v786 = vrot.slane %v779, %v785
        %v787 = vcombine.low %v761, %v762
        %v789 = vunpack.c.l.s4 1983009808
        %v790 = vunpack.c.0.s8 %v789
        %v791 = vlaneseq
        %v792 = vshrl.u32 %v791, 7
        %v793 = vsub.s32 %v790, %v792
        %v794 = vrot.slane %v787, %v793
        %v795 = vcombine.low %v770, %v778
        %v796 = vcombine.high %v770, %v778
        %v798 = vunpack.c.l.s4 1934713408
        %v799 = vunpack.c.0.s8 %v798
        %v800 = vlaneseq
        %v801 = vshrl.u32 %v800, 7
        %v802 = vsub.s32 %v799, %v801
        %v803 = vrot.slane %v795, %v802
        %v805 = vunpack.c.l.s4 1934713408
        %v806 = vunpack.c.0.s8 %v805
        %v807 = vlaneseq
        %v808 = vshrl.u32 %v807, 7
        %v809 = vsub.s32 %v806, %v808
        %v810 = vrot.slane %v796, %v809
        %v811 = vcombine.low %v786, %v794
        %v812 = vcombine.high %v786, %v794
        %v814 = vunpack.c.l.s4 1934713408
        %v815 = vunpack.c.0.s8 %v814
        %v816 = vlaneseq
        %v817 = vshrl.u32 %v816, 7
        %v818 = vsub.s32 %v815, %v817
        %v819 = vrot.slane %v811, %v818
        %v821 = vunpack.c.l.s4 1934713408
        %v822 = vunpack.c.0.s8 %v821
        %v823 = vlaneseq
        %v824 = vshrl.u32 %v823, 7
        %v825 = vsub.s32 %v822, %v824
        %v826 = vrot.slane %v812, %v825
        %v827 = vcombine.low %v803, %v819
        %v828 = vcombine.high %v803, %v819
        %v829 = vcombine.low %v810, %v826
        %v830 = vcombine.high %v810, %v826
        %v831 = vpack.c.bf16 %v827, %v827
        %v832 = vpack.c.bf16 %v828, %v828
        %v833 = vpack.c.bf16 %v829, %v829
        %v834 = vpack.c.bf16 %v830, %v830
        %835 = vst.msk [vmem:[%s293] sm:$0xf] %vm515, %v831
        %836 = vst.msk [vmem:[%s293 + $0x4] sm:$0xf] %vm515, %v832
        %837 = vst.msk [vmem:[%s293 + $0x8] sm:$0xf] %vm515, %v833
        %838 = vst.msk [vmem:[%s293 + $0xc] sm:$0xf] %vm515, %v834
        %s839 = sand.u32 %s119, 1
        %s840 = scalar_lea.sflag [#allocation4], %s839
        %s841 = sand.u32 %s119, 1
        %s842 = smul.addr %s841, 16
        %s843 = scalar_lea.vmem [#allocation7], %s842
        %s844 = sand.u32 %s27, 1
        %s845 = scalar_lea.sflag [#allocation9], %s844
        %s846 = sand.u32 %s147, 1
        %s847 = smul.addr %s846, 16
        %s848 = scalar_lea.vmem [#allocation8], %s847
        %s849 = sand.u32 %s27, 1
        %s850 = scalar_lea.sflag [#allocation9], %s849
        %s851 = sand.u32 %s175, 1
        %s852 = smul.addr %s851, 16
        %s853 = scalar_lea.vmem [#allocation10], %s852
        // Predicated region
        $region41: #{tpu_custom_call.1} parent=31 // pred_check
          %p854 = pneg %p129
        $region42: #{tpu_custom_call.1} parent=31 // pred_check_branch
          %856 = sbr.rel (%p854) target = $region44
        $region43: #{tpu_custom_call.1} parent=31 // pred_region
          %s858 = ssub.s32 256, 256
          %859 = vsyncadd %s840, %s858
          %s860 = smul.addr %s31, 4
          %s861 = sadd.s32 %s32, %s860
          %s862 = smul.addr %s861, 64
          %s863 = scalar_lea.hbm %s3, %s862
          %s864 = sshll.u32 %s843, 4
          %s865 = int_to_ptr.vmem [resolvable:$true] %s864
          %870 = dma.vmem_to_hbm [thread:$0]  %s865, 256, %s863, %s840, 64, 64, 4
        $region44: #{tpu_custom_call.1} parent=31 // pred_fallthru
          _
        // Predicated region
        $region45: #{tpu_custom_call.1} parent=31 // pred_check
          %p871 = pneg %p157
        $region46: #{tpu_custom_call.1} parent=31 // pred_check_branch
          %873 = sbr.rel (%p871) target = $region48
        $region47: #{tpu_custom_call.1} parent=31 // pred_region
          %s875 = ssub.s32 256, 256
          %876 = vsyncadd %s845, %s875
          %s877 = smul.addr %s31, 4
          %s878 = sadd.s32 %s32, %s877
          %s879 = smul.addr %s878, 64
          %s880 = scalar_lea.hbm %s4, %s879
          %s881 = sshll.u32 %s848, 4
          %s882 = int_to_ptr.vmem [resolvable:$true] %s881
          %887 = dma.vmem_to_hbm [thread:$0]  %s882, 256, %s880, %s845, 64, 64, 4
        $region48: #{tpu_custom_call.1} parent=31 // pred_fallthru
          _
        // Predicated region
        $region49: #{tpu_custom_call.1} parent=31 // pred_check
          %p888 = pneg %p185
        $region50: #{tpu_custom_call.1} parent=31 // pred_check_branch
          %890 = sbr.rel (%p888) target = $region52
        $region51: #{tpu_custom_call.1} parent=31 // pred_region
          %s892 = ssub.s32 256, 256
          %893 = vsyncadd %s850, %s892
          %s894 = smul.addr %s31, 4
          %s895 = sadd.s32 %s32, %s894
          %s896 = smul.addr %s895, 64
          %s897 = scalar_lea.hbm %s5, %s896
          %s898 = sshll.u32 %s853, 4
          %s899 = int_to_ptr.vmem [resolvable:$true] %s898
          %904 = dma.vmem_to_hbm [thread:$0]  %s899, 256, %s897, %s850, 64, 64, 4
        $region52: #{tpu_custom_call.1} parent=31 // pred_fallthru
          _
      $region32: #{tpu_custom_call.1} parent=5 // pred_fallthru
        _
      %p905 = scmp.le.s32.totalorder 2, %s22
      // Predicated region
      $region53: #{tpu_custom_call.1} parent=5 // pred_check
        %p906 = pneg %p905
      $region54: #{tpu_custom_call.1} parent=5 // pred_check_branch
        %908 = sbr.rel (%p906) target = $region56
      $region55: #{tpu_custom_call.1} parent=5 // pred_region
        %s909 = ssub.s32 %s22, 2
        // Predicated region
        $region57: #{tpu_custom_call.1} parent=55 // pred_check
          %p910 = pneg %p135
        $region58: #{tpu_custom_call.1} parent=55 // pred_check_branch
          %912 = sbr.rel (%p910) target = $region60
        $region59: #{tpu_custom_call.1} parent=55 // pred_region
          %s913 = sand.u32 %s120, 1
          %s914 = scalar_lea.sflag [#allocation4], %s913
          %s915 = sand.u32 %s120, 1
          %s916 = smul.addr %s915, 16
          %s917 = scalar_lea.vmem [#allocation7], %s916
          %918 = dma.done %s914, 256
        $region60: #{tpu_custom_call.1} parent=55 // pred_fallthru
          _
        // Predicated region
        $region61: #{tpu_custom_call.1} parent=55 // pred_check
          %p919 = pneg %p163
        $region62: #{tpu_custom_call.1} parent=55 // pred_check_branch
          %921 = sbr.rel (%p919) target = $region64
        $region63: #{tpu_custom_call.1} parent=55 // pred_region
          %s922 = sand.u32 %s28, 1
          %s923 = scalar_lea.sflag [#allocation9], %s922
          %s924 = sand.u32 %s148, 1
          %s925 = smul.addr %s924, 16
          %s926 = scalar_lea.vmem [#allocation8], %s925
          %927 = dma.done %s923, 256
        $region64: #{tpu_custom_call.1} parent=55 // pred_fallthru
          _
        // Predicated region
        $region65: #{tpu_custom_call.1} parent=55 // pred_check
          %p928 = pneg %p191
        $region66: #{tpu_custom_call.1} parent=55 // pred_check_branch
          %930 = sbr.rel (%p928) target = $region68
        $region67: #{tpu_custom_call.1} parent=55 // pred_region
          %s931 = sand.u32 %s28, 1
          %s932 = scalar_lea.sflag [#allocation9], %s931
          %s933 = sand.u32 %s176, 1
          %s934 = smul.addr %s933, 16
          %s935 = scalar_lea.vmem [#allocation10], %s934
          %936 = dma.done %s932, 256
        $region68: #{tpu_custom_call.1} parent=55 // pred_fallthru
          _
      $region56: #{tpu_custom_call.1} parent=5 // pred_fallthru
        _
    $region6: #{tpu_custom_call.1} parent=1 // loop_footer
      %s26 = sadd.s32 1, %s22
    $region7: #{tpu_custom_call.1} parent=1 // loop_footer_branch
      %21 = sbr.rel target = $region3
    $region8: #{tpu_custom_call.1} parent=1 // loop_exit
      _
    %937 = vsyncpa [#allocation3], 1
    %s938 = scalar_lea.sflag [#allocation3], 1
    %939 = vsyncpa %s938, 1
    %940 = vsyncpa [#allocation6], 1
    %941 = vsyncpa [#allocation4], 1
    %s942 = scalar_lea.sflag [#allocation4], 1
    %943 = vsyncpa %s942, 1
    %944 = vsyncpa [#allocation9], 1
    %s945 = scalar_lea.sflag [#allocation9], 1
    %946 = vsyncpa %s945, 1

</llo_original>
